<compile_context>
chip_gen: v5e
topology: v5e:2x2
jax: 0.10.0
libtpu: 0.0.40
codegen_flags: <defaults>
</compile_context>

<pallas_src>
import functools

import jax
import jax.numpy as jnp
from jax.experimental import pallas as pl
from jax.experimental.pallas import tpu as pltpu


def _masked_nll_partial_kernel(pred_ref, tgt_ref, wm_ref, out_ref, *, n_rows):
    """Per-row-tile partial sums: out[0, 0, 0] = num, out[0, 1, 0] = den."""
    tm, c = pred_ref.shape

    pred = pred_ref[...]                       # (tm, C) native dtype (no host upcast)
    tgt = tgt_ref[...]                         # (tm, 1) int32 class ids
    wm = wm_ref[...]                           # (tm, 1) f32 = weight[target] * mask

    # pred[r, t_r] via lane-iota predicated select + lane reduction
    # (no data-dependent loads, no float one-hot materialization).
    lane = jax.lax.broadcasted_iota(jnp.int32, (tm, c), 1)
    sel = jnp.where(lane == tgt, pred, jnp.zeros((), pred.dtype))
    picked = jnp.sum(sel.astype(jnp.float32), axis=-1, keepdims=True)   # (tm, 1)

    num_terms = picked * wm                    # (tm, 1)
    den_terms = wm                             # (tm, 1)

    if n_rows % tm != 0:
        # Remainder block: rows past N hold undefined VMEM; *select* them away
        # (a mask multiply would propagate NaN/Inf from garbage).
        i = pl.program_id(0)
        row = i * tm + jax.lax.broadcasted_iota(jnp.int32, (tm, 1), 0)
        valid = row < n_rows
        num_terms = jnp.where(valid, num_terms, 0.0)
        den_terms = jnp.where(valid, den_terms, 0.0)

    num = jnp.sum(num_terms)
    den = jnp.sum(den_terms)

    # Lane-dense (8, 128) partial block: num on sublane 0, den on sublane 1.
    sub = jax.lax.broadcasted_iota(jnp.int32, (8, 128), 0)
    blk = jnp.where(sub == 0, num, jnp.where(sub == 1, den, 0.0))
    out_ref[0] = blk.astype(out_ref.dtype)


def masked_nll_loss(pred, target, mask, weight=None, *, row_tile=None):
    """pred: [N, C] log-probs (any float dtype), target: [N] int, mask: [N]-ish.

    Returns the scalar masked NLL loss, matching MaskedNLLLoss.forward.
    """
    pred = jnp.asarray(pred)
    pred = pred.reshape(-1, pred.shape[-1])
    n, c = pred.shape
    target = jnp.reshape(jnp.asarray(target), (-1,)).astype(jnp.int32)
    mask_f = jnp.reshape(jnp.asarray(mask), (-1,)).astype(jnp.float32)
    assert target.shape[0] == n and mask_f.shape[0] == n

    # weight=None is equivalent to all-ones class weights in both branches.
    # weight[target] * mask is a trivial (N,)-sized XLA gather done once here.
    if weight is None:
        wm = mask_f
    else:
        wm = jnp.asarray(weight, jnp.float32)[target] * mask_f

    itemsize = jnp.dtype(pred.dtype).itemsize
    sub = max(8, 32 // itemsize)               # sublane multiple: 8 f32, 16 bf16

    # VMEM budget: ~75% of physical capacity (≈96 MiB v5e/v6e, ≈48 MiB v7x).
    try:
        vmem_cap = int(pltpu.get_tpu_info().vmem_capacity_bytes)
    except Exception:
        vmem_cap = 64 << 20
    budget = (vmem_cap * 3) // 4

    row_bytes = c * itemsize + 8               # pred row + target(4) + wm(4)
    # 2x double-buffered inputs + ~1 pred-tile of compiler temporaries.
    tm_cap = max(sub, (budget - (4 << 20)) // (3 * row_bytes))
    tm_pref = max(sub, (4 << 20) // row_bytes)  # aim ~4 MiB pred tile

    tm = int(row_tile) if row_tile is not None else min(tm_pref, tm_cap)
    if n <= sub:
        tm = n                                  # block dim == full array dim (exempt)
    else:
        tm = max(sub, (min(tm, tm_cap, n) // sub) * sub)

    g = pl.cdiv(n, tm)

    pred_tile_bytes = tm * c * itemsize
    vmem_limit = int(min(budget, max(32 << 20, 4 * pred_tile_bytes + (4 << 20))))

    cost = pl.CostEstimate(
        flops=3 * n * c,                        # compare + select + lane-reduce add
        transcendentals=0,
        bytes_accessed=n * c * itemsize + n * 8 + g * 8 * 128 * 4,
    )

    kernel = functools.partial(_masked_nll_partial_kernel, n_rows=n)

    partials = pl.pallas_call(
        kernel,
        out_shape=jax.ShapeDtypeStruct((g, 8, 128), jnp.float32),
        grid=(g,),
        in_specs=[
            pl.BlockSpec((tm, c), lambda i: (i, 0)),    # pred: native dtype, unpadded
            pl.BlockSpec((tm, 1), lambda i: (i, 0)),    # target ids
            pl.BlockSpec((tm, 1), lambda i: (i, 0)),    # weight[target] * mask
        ],
        out_specs=pl.BlockSpec((1, 8, 128), lambda i: (i, 0, 0)),
        compiler_params=pltpu.CompilerParams(
            dimension_semantics=("parallel",),  # no carried state -> megacore split (v7x)
            vmem_limit_bytes=vmem_limit,
        ),
        cost_estimate=cost,
    )(pred, target.reshape(n, 1), wm.reshape(n, 1))

    num = jnp.sum(partials[:, 0, 0])
    den = jnp.sum(partials[:, 1, 0])            # 0 -> NaN/Inf, same as torch reference
    return -(num / den)


def _reference(pred, target, mask, weight=None):
    pred = jnp.asarray(pred, jnp.float32)
    mask_f = jnp.reshape(mask, (-1,)).astype(jnp.float32)
    picked = jnp.take_along_axis(pred, target[:, None].astype(jnp.int32), axis=1)[:, 0]
    if weight is None:
        w_t = jnp.ones_like(picked)
        denom = jnp.sum(mask_f)
    else:
        w_t = jnp.asarray(weight, jnp.float32)[target]
        denom = jnp.sum(w_t * mask_f)
    return -jnp.sum(w_t * picked * mask_f) / denom


if __name__ == "__main__":
    key = jax.random.PRNGKey(0)
    B, S, C = 2, 8, 7            # batch=2, seq=8 -> N=16 rows, 7 classes
    N = B * S

    k_logit, k_tgt, k_mask, k_w = jax.random.split(key, 4)
    logits = jax.random.normal(k_logit, (N, C), dtype=jnp.float32)
    pred = jax.nn.log_softmax(logits, axis=-1)                       # NLLLoss input: log-probs
    target = jax.random.randint(k_tgt, (N,), 0, C, dtype=jnp.int32)
    mask = (jax.random.uniform(k_mask, (N,)) > 0.3).astype(jnp.float32)
    mask = mask.at[0].set(1.0)   # guarantee non-zero denominator

    # 1) Default path (weight=None), auto tile size.
    loss = jax.block_until_ready(masked_nll_loss(pred, target, mask))
    ref = _reference(pred, target, mask, None)
    assert abs(float(loss) - float(ref)) < 1e-5 * (1.0 + abs(float(ref)))

    # 2) Weighted path, forced small tile -> multi-step grid + out-of-kernel finalize.
    weight = jax.random.uniform(k_w, (C,), minval=0.5, maxval=1.5, dtype=jnp.float32)
    loss_w = jax.block_until_ready(masked_nll_loss(pred, target, mask, weight, row_tile=8))
    ref_w = _reference(pred, target, mask, weight)
    assert abs(float(loss_w) - float(ref_w)) < 1e-5 * (1.0 + abs(float(ref_w)))

    # 3) Ragged row count (N=13, tm=8) -> exercises the in-kernel validity select.
    Nr = 13
    loss_r = jax.block_until_ready(
        masked_nll_loss(pred[:Nr], target[:Nr], mask[:Nr], weight, row_tile=8))
    ref_r = _reference(pred[:Nr], target[:Nr], mask[:Nr], weight)
    assert abs(float(loss_r) - float(ref_r)) < 1e-5 * (1.0 + abs(float(ref_r)))

    # 4) bf16 pred DMA'd in native dtype (halved HBM traffic), f32 accumulation.
    pred_bf16 = pred.astype(jnp.bfloat16)
    loss_b = jax.block_until_ready(masked_nll_loss(pred_bf16, target, mask))
    ref_b = _reference(pred_bf16.astype(jnp.float32), target, mask, None)
    assert abs(float(loss_b) - float(ref_b)) < 1e-2 * (1.0 + abs(float(ref_b)))

    print("KERNEL_OK")
</pallas_src>

<mosaic_0001>
module attributes {stable_mosaic.version = 11 : i64} {
  func.func @_masked_nll_partial_kernel(%arg0: i32, %arg1: memref<16x7xf32, #tpu.memory_space<vmem>>, %arg2: memref<16x1xi32, #tpu.memory_space<vmem>>, %arg3: memref<16x1xf32, #tpu.memory_space<vmem>>, %arg4: memref<1x8x128xf32, #tpu.memory_space<vmem>>) attributes {dimension_semantics = [#tpu.dimension_semantics<parallel>], iteration_bounds = array<i64: 1>, scalar_prefetch = 0 : i64, scratch_operands = 0 : i64, tpu.core_type = #tpu.core_type<tc>, window_params = [{transform_indices = @transform_0, window_bounds = array<i64: 16, 7>}, {transform_indices = @transform_1, window_bounds = array<i64: 16, 1>}, {transform_indices = @transform_2, window_bounds = array<i64: 16, 1>}, {transform_indices = @transform_3, window_bounds = array<i64: 1, 8, 128>}]} {
    %c0 = arith.constant 0 : index
    %c0_0 = arith.constant 0 : index
    %0 = vector.load %arg1[%c0, %c0_0] : memref<16x7xf32, #tpu.memory_space<vmem>>, vector<16x7xf32>
    %c0_1 = arith.constant 0 : index
    %c0_2 = arith.constant 0 : index
    %1 = vector.load %arg2[%c0_1, %c0_2] : memref<16x1xi32, #tpu.memory_space<vmem>>, vector<16x1xi32>
    %c0_3 = arith.constant 0 : index
    %c0_4 = arith.constant 0 : index
    %2 = vector.load %arg3[%c0_3, %c0_4] : memref<16x1xf32, #tpu.memory_space<vmem>>, vector<16x1xf32>
    %3 = tpu.iota {dimensions = array<i32: 1>} : vector<16x7xi32>
    %4 = vector.broadcast %1 : vector<16x1xi32> to vector<16x7xi32>
    %5 = arith.cmpi eq, %3, %4 : vector<16x7xi32>
    %cst = arith.constant 0.000000e+00 : f32
    %6 = vector.broadcast %cst : f32 to vector<16x7xf32>
    %7 = arith.select %5, %0, %6 : vector<16x7xi1>, vector<16x7xf32>
    %cst_5 = arith.constant dense<0.000000e+00> : vector<16xf32>
    %8 = vector.multi_reduction <add>, %7, %cst_5 [1] : vector<16x7xf32> to vector<16xf32>
    %9 = vector.shape_cast %8 : vector<16xf32> to vector<16x1xf32>
    %10 = arith.mulf %9, %2 : vector<16x1xf32>
    %11 = vector.shape_cast %10 : vector<16x1xf32> to vector<1x16x1xf32>
    %cst_6 = arith.constant dense<0.000000e+00> : vector<1xf32>
    %12 = vector.multi_reduction <add>, %11, %cst_6 [1, 2] : vector<1x16x1xf32> to vector<1xf32>
    %13 = vector.shape_cast %12 : vector<1xf32> to vector<1x1x1xf32>
    %14 = vector.extract %13[0, 0, 0] : f32 from vector<1x1x1xf32>
    %15 = vector.shape_cast %2 : vector<16x1xf32> to vector<1x16x1xf32>
    %cst_7 = arith.constant dense<0.000000e+00> : vector<1xf32>
    %16 = vector.multi_reduction <add>, %15, %cst_7 [1, 2] : vector<1x16x1xf32> to vector<1xf32>
    %17 = vector.shape_cast %16 : vector<1xf32> to vector<1x1x1xf32>
    %18 = vector.extract %17[0, 0, 0] : f32 from vector<1x1x1xf32>
    %19 = tpu.iota {dimensions = array<i32: 0>} : vector<8x128xi32>
    %c0_i32 = arith.constant 0 : i32
    %20 = vector.broadcast %c0_i32 : i32 to vector<8x128xi32>
    %21 = arith.cmpi eq, %19, %20 : vector<8x128xi32>
    %c1_i32 = arith.constant 1 : i32
    %22 = vector.broadcast %c1_i32 : i32 to vector<8x128xi32>
    %23 = arith.cmpi eq, %19, %22 : vector<8x128xi32>
    %cst_8 = arith.constant 0.000000e+00 : f32
    %24 = vector.broadcast %18 : f32 to vector<8x128xf32>
    %25 = vector.broadcast %cst_8 : f32 to vector<8x128xf32>
    %26 = arith.select %23, %24, %25 : vector<8x128xi1>, vector<8x128xf32>
    %27 = vector.broadcast %14 : f32 to vector<8x128xf32>
    %28 = arith.select %21, %27, %26 : vector<8x128xi1>, vector<8x128xf32>
    %c0_9 = arith.constant 0 : index
    %c0_10 = arith.constant 0 : index
    %c0_11 = arith.constant 0 : index
    %29 = vector.load %arg4[%c0_9, %c0_10, %c0_11] : memref<1x8x128xf32, #tpu.memory_space<vmem>>, vector<1x8x128xf32>
    %30 = vector.shape_cast %29 : vector<1x8x128xf32> to vector<8x128xf32>
    %31 = vector.shape_cast %28 : vector<8x128xf32> to vector<1x8x128xf32>
    tpu.vector_store %arg4[%c0_9, %c0_10, %c0_11], %31 {strides = array<i32>} : memref<1x8x128xf32, #tpu.memory_space<vmem>>, vector<1x8x128xf32>,
    return
  }
  func.func @transform_0(%arg0: i32) -> (i32, i32) {
    %c0_i32 = arith.constant 0 : i32
    %c0_i32_0 = arith.constant 0 : i32
    return %arg0, %c0_i32 : i32, i32
  }
  func.func @transform_1(%arg0: i32) -> (i32, i32) {
    %c0_i32 = arith.constant 0 : i32
    %c0_i32_0 = arith.constant 0 : i32
    return %arg0, %c0_i32 : i32, i32
  }
  func.func @transform_2(%arg0: i32) -> (i32, i32) {
    %c0_i32 = arith.constant 0 : i32
    %c0_i32_0 = arith.constant 0 : i32
    return %arg0, %c0_i32 : i32, i32
  }
  func.func @transform_3(%arg0: i32) -> (i32, i32, i32) {
    %c0_i32 = arith.constant 0 : i32
    %c0_i32_0 = arith.constant 0 : i32
    %c0_i32_1 = arith.constant 0 : i32
    return %arg0, %c0_i32, %c0_i32_0 : i32, i32, i32
  }
}

</mosaic_0001>

<llo_original>
// kernel: tpu_custom_call.1
$region0: #{tpu_custom_call.1}
  #allocation0 [shape = 'u32[]', space=smem, size = 0x4, offset = 0x4, fixed_abs, tag = 'smem constant byte address 0x4 - core index']
  #allocation1 [shape = 'u32[72,128]{1,0:T(1,128)}', space=vmem, size = 0x9000, scoped, tag = 'internal scratch']
  %s0 = inlined_call_operand.vmem [shape: f32[16,7], index: 0, kind: input, shape index: {}]
  %s1 = inlined_call_operand.vmem [shape: s32[16,1], index: 1, kind: input, shape index: {}]
  %s2 = inlined_call_operand.vmem [shape: f32[16,1], index: 2, kind: input, shape index: {}]
  %s3 = inlined_call_operand.hbm [shape: f32[1,8,128], index: 3, kind: output, shape index: {}]
  %s4 = sld [smem:[#allocation0]]
  $region22: #{tpu_custom_call.1} parent=0
    _
  %s6 = ssub.s32 1, %s4
  %s7 = scalar_select 0, %s6, %s4
  $region1: #{tpu_custom_call.1} parent=0
    #allocation2 [shape = 'u8[4096]{0}', space=vmem, size = 0x1000, scoped, tag = 'output window, operand 0, single buffered']
    #allocation3 [shape = 's32[1]{0}', space=sflag, size = 0x4, scoped, tag = 'scoped memory for tpu_custom_call.1']
    %8 = vsyncpa [#allocation3], 0
    // Predicated region
    $region2: #{tpu_custom_call.1} parent=1 // pred_check
      _
    $region3: #{tpu_custom_call.1} parent=1 // pred_check_branch
      %10 = sbr.rel (0) target = $region5
    $region4: #{tpu_custom_call.1} parent=1 // pred_region
      _
    $region5: #{tpu_custom_call.1} parent=1 // pred_fallthru
      _
    // Predicated region
    $region6: #{tpu_custom_call.1} parent=1 // pred_check
      _
    $region7: #{tpu_custom_call.1} parent=1 // pred_check_branch
      %12 = sbr.rel (0) target = $region9
    $region8: #{tpu_custom_call.1} parent=1 // pred_region
      _
    $region9: #{tpu_custom_call.1} parent=1 // pred_fallthru
      _
    // Predicated region
    $region10: #{tpu_custom_call.1} parent=1 // pred_check
      _
    $region11: #{tpu_custom_call.1} parent=1 // pred_check_branch
      %14 = sbr.rel (0) target = $region13
    $region12: #{tpu_custom_call.1} parent=1 // pred_region
      _
    $region13: #{tpu_custom_call.1} parent=1 // pred_fallthru
      _
    %v15 = vld [vmem:[%s0] sm:$0xff]
    %v16 = vld [vmem:[%s0 + $0x8] sm:$0xff]
    %v17 = vld [vmem:[%s1] sm:$0xff]
    %v18 = vld [vmem:[%s1 + $0x8] sm:$0xff]
    %v19 = vld [vmem:[%s2] sm:$0xff]
    %v20 = vld [vmem:[%s2 + $0x8] sm:$0xff]
    %v21 = vlaneseq
    %v22 = vand.u32 %v21, 127
    %23 = vset.pattern.permute.xlu0 0
    %24 = vperm.xlu0 %23, %v17
    %v25 = vpop.permute.xlu0 %24
    %26 = vset.pattern.permute.xlu0 0
    %27 = vperm.xlu0 %26, %v18
    %v28 = vpop.permute.xlu0 %27
    %vm29 = vcmp.eq.s32.totalorder %v22, %v25
    %vm30 = vcmp.eq.s32.totalorder %v22, %v28
    %v31 = vsel %vm29, %v15, 0.0
    %v32 = vsel %vm30, %v16, 0.0
    %vm33 = vcmask 56320
    %v34 = vsel %vm33, %v31, 0.0
    %35 = vadd.xlane.f32.xlu0 %v34
    %v36 = vpop.xlane.xlu0 %35
    %v37 = vsel %vm33, %v32, 0.0
    %38 = vadd.xlane.f32.xlu0 %v37
    %v39 = vpop.xlane.xlu0 %38
    %v40 = vmul.f32 %v36, %v19
    %v41 = vmul.f32 %v39, %v20
    %vm42 = vcmask 7168
    %v43 = vsel %vm42, %v40, 0.0
    %v44 = vsel %vm42, %v41, 0.0
    %v45 = vadd.f32 %v43, %v44
    %46 = vadd.xlane.f32.xlu0 %v45
    %v47 = vpop.xlane.xlu0 %46
    %v48 = vrot.slane %v47, 4
    %v49 = vadd.f32 %v47, %v48
    %v50 = vrot.slane %v49, 2
    %v51 = vadd.f32 %v49, %v50
    %v52 = vrot.slane %v51, 1
    %v53 = vadd.f32 %v51, %v52
    %s54 = vtos %v53
    %v55 = vsel %vm42, %v19, 0.0
    %v56 = vsel %vm42, %v20, 0.0
    %v57 = vadd.f32 %v55, %v56
    %58 = vadd.xlane.f32.xlu0 %v57
    %v59 = vpop.xlane.xlu0 %58
    %v60 = vrot.slane %v59, 4
    %v61 = vadd.f32 %v59, %v60
    %v62 = vrot.slane %v61, 2
    %v63 = vadd.f32 %v61, %v62
    %v64 = vrot.slane %v63, 1
    %v65 = vadd.f32 %v63, %v64
    %s66 = vtos %v65
    %v67 = vlaneseq
    %v68 = vshrl.u32 %v67, 7
    %vm69 = vcmp.eq.s32.totalorder %v68, 0
    %vm70 = vcmp.eq.s32.totalorder %v68, 1
    %v71 = vstv %s66
    %v72 = vsel %vm70, %v71, 0.0
    %v73 = vstv %s54
    %v74 = vsel %vm69, %v73, %v72
    %75 = vst [vmem:[#allocation2] sm:$0xff] %v74
    // Predicated region
    $region14: #{tpu_custom_call.1} parent=1 // pred_check
      _
    $region15: #{tpu_custom_call.1} parent=1 // pred_check_branch
      %77 = sbr.rel (0) target = $region17
    $region16: #{tpu_custom_call.1} parent=1 // pred_region
      %79 = vsyncadd [#allocation3], 0
      %s81 = sshll.u32 [#allocation2], 4
      %s82 = int_to_ptr.vmem [resolvable:$true] %s81
      %s83 = sshll.u32 %s3, 4
      %s84 = int_to_ptr.hbm [resolvable:$true] %s83
      %86 = dma.vmem_to_hbm [thread:$0]  %s82, 128, %s84, [#allocation3]
    $region17: #{tpu_custom_call.1} parent=1 // pred_fallthru
      _
    // Predicated region
    $region18: #{tpu_custom_call.1} parent=1 // pred_check
      _
    $region19: #{tpu_custom_call.1} parent=1 // pred_check_branch
      %88 = sbr.rel (0) target = $region21
    $region20: #{tpu_custom_call.1} parent=1 // pred_region
      %90 = dma.done [#allocation3], 128
    $region21: #{tpu_custom_call.1} parent=1 // pred_fallthru
      _
    %91 = vsyncpa [#allocation3], 1

</llo_original>
